<compile_context>
chip_gen: v7x
topology: tpu7x:2x2x1
jax: 0.10.0
libtpu: 0.0.40
codegen_flags: <defaults>
</compile_context>

<pallas_src>
import jax
import jax.numpy as jnp
from jax.experimental import pallas as pl
from jax.experimental.pallas import tpu as pltpu

LN_EPS = 1e-5   # torch.nn.LayerNorm default eps
LANES = 128     # lane-dense output slab width


def _round_up(n, m):
    return ((n + m - 1) // m) * m


def _w1_offsets(obs_dim, goal_dim, action_dim):
    """8-aligned row offsets of the three W1 segments inside w_packed."""
    obs_off = 0
    goal_off = _round_up(obs_dim, 8)
    act_off = goal_off + _round_up(goal_dim, 8)
    k1 = act_off + _round_up(action_dim, 8)
    return obs_off, goal_off, act_off, k1


def _make_critic_kernel(obs_dim, goal_dim, action_dim, hidden):
    obs_off, goal_off, act_off, k1 = _w1_offsets(obs_dim, goal_dim, action_dim)
    h2 = 2 * hidden
    w2_off = k1
    w3_off = k1 + h2
    inv_h = 1.0 / hidden

    def kernel(obs_ref, goal_ref, act_ref, w_ref, v_ref, b4_ref, q_ref):
        # Per-head lane mask: lanes [0, H) -> head 1, [H, 2H) -> head 2.
        lane = jax.lax.broadcasted_iota(jnp.int32, (1, h2), 1)
        is_h1 = lane < hidden

        def seg_layernorm(x, gamma, beta):
            # LayerNorm over each head's H lanes separately (segmented stats).
            s1 = jnp.sum(jnp.where(is_h1, x, 0.0), axis=-1, keepdims=True)
            s2 = jnp.sum(jnp.where(is_h1, 0.0, x), axis=-1, keepdims=True)
            mean = jnp.where(is_h1, s1, s2) * inv_h
            c = x - mean
            sq = c * c
            v1 = jnp.sum(jnp.where(is_h1, sq, 0.0), axis=-1, keepdims=True)
            v2 = jnp.sum(jnp.where(is_h1, 0.0, sq), axis=-1, keepdims=True)
            var = jnp.where(is_h1, v1, v2) * inv_h
            return c * jax.lax.rsqrt(var + LN_EPS) * gamma + beta

        # Parameter rows: direct (zero-cost) static ref views, loaded on use.
        b1, g1, be1 = v_ref[0:1, :], v_ref[1:2, :], v_ref[2:3, :]
        b2, g2, be2 = v_ref[3:4, :], v_ref[4:5, :], v_ref[5:6, :]
        b3, w4 = v_ref[6:7, :], v_ref[7:8, :]

        # Layer 1: torch.cat fused as three partial dots into one f32
        # accumulator; both heads lane-concatenated (W1 has 2H columns).
        h = (jnp.dot(obs_ref[...], w_ref[obs_off:obs_off + obs_dim, :],
                     preferred_element_type=jnp.float32)
             + jnp.dot(goal_ref[...], w_ref[goal_off:goal_off + goal_dim, :],
                       preferred_element_type=jnp.float32)
             + jnp.dot(act_ref[...], w_ref[act_off:act_off + action_dim, :],
                       preferred_element_type=jnp.float32)
             + b1)
        h = jnp.tanh(seg_layernorm(h, g1, be1))                    # LN -> Tanh

        # Layer 2 (block-diagonal 2-head weight): Linear -> ReLU -> LN -> Tanh
        h = jnp.dot(h, w_ref[w2_off:w2_off + h2, :],
                    preferred_element_type=jnp.float32) + b2
        h = jnp.tanh(seg_layernorm(jnp.maximum(h, 0.0), g2, be2))

        # Layer 3 (block-diagonal): Linear -> ReLU
        h = jnp.maximum(
            jnp.dot(h, w_ref[w3_off:w3_off + h2, :],
                    preferred_element_type=jnp.float32) + b3, 0.0)

        # Final Linear(H -> 1) per head: VPU multiply + XLU lane reduce.
        # b4 read as scalars from SMEM (no (1,1) vector slice).
        hw = h * w4
        q1 = jnp.sum(jnp.where(is_h1, hw, 0.0), axis=-1, keepdims=True) + b4_ref[0]
        q2 = jnp.sum(jnp.where(is_h1, 0.0, hw), axis=-1, keepdims=True) + b4_ref[1]

        # Lane-dense unmasked store: q1 broadcast over lanes [0,64),
        # q2 over lanes [64,128).
        out_lane = jax.lax.broadcasted_iota(jnp.int32, q_ref.shape, 1)
        q_ref[...] = jnp.where(out_lane < (LANES // 2), q1, q2)

    return kernel


def make_critic_forward(obs_dim, goal_dim, action_dim, hidden):
    kernel = _make_critic_kernel(obs_dim, goal_dim, action_dim, hidden)
    _, _, _, k1 = _w1_offsets(obs_dim, goal_dim, action_dim)
    h2 = 2 * hidden
    kw = k1 + 2 * h2

    @jax.jit
    def forward(obs, goal, action, w_packed, v_packed, b4_pair):
        batch = obs.shape[0]
        # Batch tiling only kicks in for large batches; at small B: grid=(1,).
        tb = batch if batch <= 512 else 512
        grid = (pl.cdiv(batch, tb),)

        flops = 2 * batch * ((obs_dim + goal_dim + action_dim) * h2
                             + 2 * h2 * h2 + h2)
        bytes_accessed = 4 * (obs.size + goal.size + action.size
                              + w_packed.size + v_packed.size + batch * LANES)

        out = pl.pallas_call(
            kernel,
            out_shape=jax.ShapeDtypeStruct((batch, LANES), jnp.float32),
            grid=grid,
            in_specs=[
                pl.BlockSpec((tb, obs_dim), lambda b: (b, 0)),
                pl.BlockSpec((tb, goal_dim), lambda b: (b, 0)),
                pl.BlockSpec((tb, action_dim), lambda b: (b, 0)),
                pl.BlockSpec((kw, h2), lambda b: (0, 0)),   # weights resident
                pl.BlockSpec((8, h2), lambda b: (0, 0)),    # bias/gain rows resident
                pl.BlockSpec(memory_space=pltpu.MemorySpace.SMEM),  # b4 scalars
            ],
            out_specs=pl.BlockSpec((tb, LANES), lambda b: (b, 0)),
            compiler_params=pltpu.CompilerParams(
                dimension_semantics=("parallel",)),
            cost_estimate=pl.CostEstimate(
                flops=int(flops),
                transcendentals=int(2 * batch * h2 + 4 * batch),
                bytes_accessed=int(bytes_accessed)),
        )(obs, goal, action, w_packed, v_packed, b4_pair)

        q1 = out[:, 0:1]
        q2 = out[:, LANES // 2:LANES // 2 + 1]
        return q1, q2

    return forward


# ----------------------------------------------------------------------------
# Deterministic synthetic parameters (mirror the __init__ shapes).
# Weights stored as [in_features, out_features] so the kernel does x @ W.
# ----------------------------------------------------------------------------
def make_head_params(key, in_dim, hidden_dim):
    ks = jax.random.split(key, 8)

    def lin(kw_, kb_, fan_in, fan_out):
        s = 1.0 / (fan_in ** 0.5)
        w = jax.random.uniform(kw_, (fan_in, fan_out), jnp.float32, -s, s)
        b = jax.random.uniform(kb_, (fan_out,), jnp.float32, -s, s)
        return w, b

    w1, b1 = lin(ks[0], ks[1], in_dim, hidden_dim)
    w2, b2 = lin(ks[2], ks[3], hidden_dim, hidden_dim)
    w3, b3 = lin(ks[4], ks[5], hidden_dim, hidden_dim)
    w4, b4 = lin(ks[6], ks[7], hidden_dim, 1)
    ones = jnp.ones((hidden_dim,), jnp.float32)
    zeros = jnp.zeros((hidden_dim,), jnp.float32)
    return dict(w1=w1, b1=b1, g1=ones, be1=zeros,
                w2=w2, b2=b2, g2=ones, be2=zeros,
                w3=w3, b3=b3, w4=w4, b4=b4)


def pack_params(p1, p2, obs_dim, goal_dim, action_dim, hidden):
    """Pack both heads into w_packed (K1+4H, 2H), v_packed (8, 2H), b4 (2,)."""
    h2 = 2 * hidden
    obs_off, goal_off, act_off, k1 = _w1_offsets(obs_dim, goal_dim, action_dim)
    kw = k1 + 2 * h2
    w = jnp.zeros((kw, h2), jnp.float32)

    # W1: both heads lane-concatenated, segments at 8-aligned row offsets.
    w1b = jnp.concatenate([p1["w1"], p2["w1"]], axis=1)              # (in_dim, 2H)
    w = w.at[obs_off:obs_off + obs_dim, :].set(w1b[0:obs_dim])
    w = w.at[goal_off:goal_off + goal_dim, :].set(
        w1b[obs_dim:obs_dim + goal_dim])
    w = w.at[act_off:act_off + action_dim, :].set(w1b[obs_dim + goal_dim:])
    # W2, W3: block-diagonal over the two heads.
    w = w.at[k1:k1 + hidden, 0:hidden].set(p1["w2"])
    w = w.at[k1 + hidden:k1 + h2, hidden:h2].set(p2["w2"])
    w3_off = k1 + h2
    w = w.at[w3_off:w3_off + hidden, 0:hidden].set(p1["w3"])
    w = w.at[w3_off + hidden:w3_off + h2, hidden:h2].set(p2["w3"])

    cat = lambda a, b: jnp.concatenate([a, b], axis=0)
    v = jnp.stack([
        cat(p1["b1"], p2["b1"]), cat(p1["g1"], p2["g1"]), cat(p1["be1"], p2["be1"]),
        cat(p1["b2"], p2["b2"]), cat(p1["g2"], p2["g2"]), cat(p1["be2"], p2["be2"]),
        cat(p1["b3"], p2["b3"]), cat(p1["w4"][:, 0], p2["w4"][:, 0]),
    ], axis=0)                                                       # (8, 2H)
    b4 = jnp.array([p1["b4"][0], p2["b4"][0]], jnp.float32)          # (2,)
    return w, v, b4


# ----------------------------------------------------------------------------
# Pure-JAX reference of the same math (unfused, per head).
# ----------------------------------------------------------------------------
def _layernorm_ref(x, gamma, beta):
    mean = jnp.mean(x, axis=-1, keepdims=True)
    c = x - mean
    var = jnp.mean(c * c, axis=-1, keepdims=True)
    return c * jax.lax.rsqrt(var + LN_EPS) * gamma + beta


def reference_q(x, p):
    hi = jax.lax.Precision.HIGHEST
    h = jnp.dot(x, p["w1"], precision=hi) + p["b1"]
    h = jnp.tanh(_layernorm_ref(h, p["g1"], p["be1"]))
    h = jnp.maximum(jnp.dot(h, p["w2"], precision=hi) + p["b2"], 0.0)
    h = jnp.tanh(_layernorm_ref(h, p["g2"], p["be2"]))
    h = jnp.maximum(jnp.dot(h, p["w3"], precision=hi) + p["b3"], 0.0)
    return jnp.dot(h, p["w4"], precision=hi) + p["b4"]


if __name__ == "__main__":
    # Small shapes consistent with the module's forward.
    batch, obs_dim, goal_dim, action_dim, hidden_dim = 8, 11, 3, 4, 32
    in_dim = obs_dim + goal_dim + action_dim

    key = jax.random.PRNGKey(0)
    k_obs, k_goal, k_act, k_q1, k_q2 = jax.random.split(key, 5)

    obs = jax.random.normal(k_obs, (batch, obs_dim), jnp.float32)
    goal = jax.random.normal(k_goal, (batch, goal_dim), jnp.float32)
    action = jax.random.normal(k_act, (batch, action_dim), jnp.float32)

    q1_params = make_head_params(k_q1, in_dim, hidden_dim)
    q2_params = make_head_params(k_q2, in_dim, hidden_dim)
    w_packed, v_packed, b4_pair = pack_params(
        q1_params, q2_params, obs_dim, goal_dim, action_dim, hidden_dim)

    critic_forward = make_critic_forward(obs_dim, goal_dim, action_dim, hidden_dim)
    q1, q2 = critic_forward(obs, goal, action, w_packed, v_packed, b4_pair)
    q1 = jax.block_until_ready(q1)
    q2 = jax.block_until_ready(q2)

    # Sanity-check against a pure-JAX reference of the same math.
    x = jnp.concatenate([obs, goal, action], axis=-1)
    r1 = reference_q(x, q1_params)
    r2 = reference_q(x, q2_params)
    assert q1.shape == (batch, 1) and q2.shape == (batch, 1)
    assert jnp.allclose(q1, r1, atol=2e-4, rtol=2e-4)
    assert jnp.allclose(q2, r2, atol=2e-4, rtol=2e-4)

    print("KERNEL_OK")
</pallas_src>

<mosaic_0001>
module attributes {stable_mosaic.version = 11 : i64} {
  func.func @kernel(%arg0: i32, %arg1: memref<8x11xf32, #tpu.memory_space<vmem>>, %arg2: memref<8x3xf32, #tpu.memory_space<vmem>>, %arg3: memref<8x4xf32, #tpu.memory_space<vmem>>, %arg4: memref<160x64xf32, #tpu.memory_space<vmem>>, %arg5: memref<8x64xf32, #tpu.memory_space<vmem>>, %arg6: memref<2xf32, #tpu.memory_space<smem>>, %arg7: memref<8x128xf32, #tpu.memory_space<vmem>>) attributes {dimension_semantics = [#tpu.dimension_semantics<parallel>], iteration_bounds = array<i64: 1>, scalar_prefetch = 0 : i64, scratch_operands = 0 : i64, tpu.core_type = #tpu.core_type<tc>, window_params = [{transform_indices = @transform_0, window_bounds = array<i64: 8, 11>}, {transform_indices = @transform_1, window_bounds = array<i64: 8, 3>}, {transform_indices = @transform_2, window_bounds = array<i64: 8, 4>}, {pipeline_mode = #tpu.pipeline_mode<synchronous>, transform_indices = @transform_3, window_bounds = array<i64: 160, 64>}, {pipeline_mode = #tpu.pipeline_mode<synchronous>, transform_indices = @transform_4, window_bounds = array<i64: 8, 64>}, {transform_indices = @transform_5, window_bounds = array<i64: 2>}, {transform_indices = @transform_6, window_bounds = array<i64: 8, 128>}]} {
    %0 = tpu.iota {dimensions = array<i32: 1>} : vector<1x64xi32>
    %c32_i32 = arith.constant 32 : i32
    %1 = vector.broadcast %c32_i32 : i32 to vector<1x64xi32>
    %2 = arith.cmpi slt, %0, %1 : vector<1x64xi32>
    %c0 = arith.constant 0 : index
    %c0_0 = arith.constant 0 : index
    %3 = vector.load %arg5[%c0, %c0_0] : memref<8x64xf32, #tpu.memory_space<vmem>>, vector<1x64xf32>
    %c1 = arith.constant 1 : index
    %c0_1 = arith.constant 0 : index
    %4 = vector.load %arg5[%c1, %c0_1] : memref<8x64xf32, #tpu.memory_space<vmem>>, vector<1x64xf32>
    %c2 = arith.constant 2 : index
    %c0_2 = arith.constant 0 : index
    %5 = vector.load %arg5[%c2, %c0_2] : memref<8x64xf32, #tpu.memory_space<vmem>>, vector<1x64xf32>
    %c3 = arith.constant 3 : index
    %c0_3 = arith.constant 0 : index
    %6 = vector.load %arg5[%c3, %c0_3] : memref<8x64xf32, #tpu.memory_space<vmem>>, vector<1x64xf32>
    %c4 = arith.constant 4 : index
    %c0_4 = arith.constant 0 : index
    %7 = vector.load %arg5[%c4, %c0_4] : memref<8x64xf32, #tpu.memory_space<vmem>>, vector<1x64xf32>
    %c5 = arith.constant 5 : index
    %c0_5 = arith.constant 0 : index
    %8 = vector.load %arg5[%c5, %c0_5] : memref<8x64xf32, #tpu.memory_space<vmem>>, vector<1x64xf32>
    %c6 = arith.constant 6 : index
    %c0_6 = arith.constant 0 : index
    %9 = vector.load %arg5[%c6, %c0_6] : memref<8x64xf32, #tpu.memory_space<vmem>>, vector<1x64xf32>
    %c7 = arith.constant 7 : index
    %c0_7 = arith.constant 0 : index
    %10 = vector.load %arg5[%c7, %c0_7] : memref<8x64xf32, #tpu.memory_space<vmem>>, vector<1x64xf32>
    %c0_8 = arith.constant 0 : index
    %c0_9 = arith.constant 0 : index
    %11 = vector.load %arg1[%c0_8, %c0_9] : memref<8x11xf32, #tpu.memory_space<vmem>>, vector<8x11xf32>
    %c0_10 = arith.constant 0 : index
    %c0_11 = arith.constant 0 : index
    %12 = vector.load %arg4[%c0_10, %c0_11] : memref<160x64xf32, #tpu.memory_space<vmem>>, vector<11x64xf32>
    %cst = arith.constant dense<0.000000e+00> : vector<8x64xf32>
    %13 = tpu.matmul %11, %12, %cst {dimension_numbers = #tpu.dot_dimension_numbers<[1], [0], [0], [1], [0, 0, 1, 1], [], []>} : vector<8x11xf32>, vector<11x64xf32>, vector<8x64xf32> -> vector<8x64xf32>
    %c0_12 = arith.constant 0 : index
    %c0_13 = arith.constant 0 : index
    %14 = vector.load %arg2[%c0_12, %c0_13] : memref<8x3xf32, #tpu.memory_space<vmem>>, vector<8x3xf32>
    %c16 = arith.constant 16 : index
    %c0_14 = arith.constant 0 : index
    %15 = vector.load %arg4[%c16, %c0_14] : memref<160x64xf32, #tpu.memory_space<vmem>>, vector<3x64xf32>
    %cst_15 = arith.constant dense<0.000000e+00> : vector<8x64xf32>
    %16 = tpu.matmul %14, %15, %cst_15 {dimension_numbers = #tpu.dot_dimension_numbers<[1], [0], [0], [1], [0, 0, 1, 1], [], []>} : vector<8x3xf32>, vector<3x64xf32>, vector<8x64xf32> -> vector<8x64xf32>
    %17 = arith.addf %13, %16 : vector<8x64xf32>
    %c0_16 = arith.constant 0 : index
    %c0_17 = arith.constant 0 : index
    %18 = vector.load %arg3[%c0_16, %c0_17] : memref<8x4xf32, #tpu.memory_space<vmem>>, vector<8x4xf32>
    %c24 = arith.constant 24 : index
    %c0_18 = arith.constant 0 : index
    %19 = vector.load %arg4[%c24, %c0_18] : memref<160x64xf32, #tpu.memory_space<vmem>>, vector<4x64xf32>
    %cst_19 = arith.constant dense<0.000000e+00> : vector<8x64xf32>
    %20 = tpu.matmul %18, %19, %cst_19 {dimension_numbers = #tpu.dot_dimension_numbers<[1], [0], [0], [1], [0, 0, 1, 1], [], []>} : vector<8x4xf32>, vector<4x64xf32>, vector<8x64xf32> -> vector<8x64xf32>
    %21 = arith.addf %17, %20 : vector<8x64xf32>
    %22 = vector.broadcast %3 : vector<1x64xf32> to vector<8x64xf32>
    %23 = arith.addf %21, %22 : vector<8x64xf32>
    %cst_20 = arith.constant 0.000000e+00 : f32
    %24 = vector.shape_cast %2 : vector<1x64xi1> to vector<1x64xi1>
    %25 = vector.broadcast %24 : vector<1x64xi1> to vector<8x64xi1>
    %26 = vector.broadcast %cst_20 : f32 to vector<8x64xf32>
    %27 = arith.select %25, %23, %26 : vector<8x64xi1>, vector<8x64xf32>
    %cst_21 = arith.constant dense<0.000000e+00> : vector<8xf32>
    %28 = vector.multi_reduction <add>, %27, %cst_21 [1] : vector<8x64xf32> to vector<8xf32>
    %29 = vector.shape_cast %28 : vector<8xf32> to vector<8x1xf32>
    %cst_22 = arith.constant 0.000000e+00 : f32
    %30 = vector.shape_cast %2 : vector<1x64xi1> to vector<1x64xi1>
    %31 = vector.broadcast %30 : vector<1x64xi1> to vector<8x64xi1>
    %32 = vector.broadcast %cst_22 : f32 to vector<8x64xf32>
    %33 = arith.select %31, %32, %23 : vector<8x64xi1>, vector<8x64xf32>
    %cst_23 = arith.constant dense<0.000000e+00> : vector<8xf32>
    %34 = vector.multi_reduction <add>, %33, %cst_23 [1] : vector<8x64xf32> to vector<8xf32>
    %35 = vector.shape_cast %34 : vector<8xf32> to vector<8x1xf32>
    %36 = vector.shape_cast %2 : vector<1x64xi1> to vector<1x64xi1>
    %37 = vector.broadcast %36 : vector<1x64xi1> to vector<8x64xi1>
    %38 = vector.shape_cast %29 : vector<8x1xf32> to vector<8x1xf32>
    %39 = vector.broadcast %38 : vector<8x1xf32> to vector<8x64xf32>
    %40 = vector.shape_cast %35 : vector<8x1xf32> to vector<8x1xf32>
    %41 = vector.broadcast %40 : vector<8x1xf32> to vector<8x64xf32>
    %42 = arith.select %37, %39, %41 : vector<8x64xi1>, vector<8x64xf32>
    %cst_24 = arith.constant 3.125000e-02 : f32
    %43 = vector.broadcast %cst_24 : f32 to vector<8x64xf32>
    %44 = arith.mulf %42, %43 : vector<8x64xf32>
    %45 = arith.subf %23, %44 : vector<8x64xf32>
    %46 = arith.mulf %45, %45 : vector<8x64xf32>
    %cst_25 = arith.constant 0.000000e+00 : f32
    %47 = vector.shape_cast %2 : vector<1x64xi1> to vector<1x64xi1>
    %48 = vector.broadcast %47 : vector<1x64xi1> to vector<8x64xi1>
    %49 = vector.broadcast %cst_25 : f32 to vector<8x64xf32>
    %50 = arith.select %48, %46, %49 : vector<8x64xi1>, vector<8x64xf32>
    %cst_26 = arith.constant dense<0.000000e+00> : vector<8xf32>
    %51 = vector.multi_reduction <add>, %50, %cst_26 [1] : vector<8x64xf32> to vector<8xf32>
    %52 = vector.shape_cast %51 : vector<8xf32> to vector<8x1xf32>
    %cst_27 = arith.constant 0.000000e+00 : f32
    %53 = vector.shape_cast %2 : vector<1x64xi1> to vector<1x64xi1>
    %54 = vector.broadcast %53 : vector<1x64xi1> to vector<8x64xi1>
    %55 = vector.broadcast %cst_27 : f32 to vector<8x64xf32>
    %56 = arith.select %54, %55, %46 : vector<8x64xi1>, vector<8x64xf32>
    %cst_28 = arith.constant dense<0.000000e+00> : vector<8xf32>
    %57 = vector.multi_reduction <add>, %56, %cst_28 [1] : vector<8x64xf32> to vector<8xf32>
    %58 = vector.shape_cast %57 : vector<8xf32> to vector<8x1xf32>
    %59 = vector.shape_cast %2 : vector<1x64xi1> to vector<1x64xi1>
    %60 = vector.broadcast %59 : vector<1x64xi1> to vector<8x64xi1>
    %61 = vector.shape_cast %52 : vector<8x1xf32> to vector<8x1xf32>
    %62 = vector.broadcast %61 : vector<8x1xf32> to vector<8x64xf32>
    %63 = vector.shape_cast %58 : vector<8x1xf32> to vector<8x1xf32>
    %64 = vector.broadcast %63 : vector<8x1xf32> to vector<8x64xf32>
    %65 = arith.select %60, %62, %64 : vector<8x64xi1>, vector<8x64xf32>
    %cst_29 = arith.constant 3.125000e-02 : f32
    %66 = vector.broadcast %cst_29 : f32 to vector<8x64xf32>
    %67 = arith.mulf %65, %66 : vector<8x64xf32>
    %cst_30 = arith.constant 9.99999974E-6 : f32
    %68 = vector.broadcast %cst_30 : f32 to vector<8x64xf32>
    %69 = arith.addf %67, %68 : vector<8x64xf32>
    %70 = math.rsqrt %69 : vector<8x64xf32>
    %71 = arith.mulf %45, %70 : vector<8x64xf32>
    %72 = vector.broadcast %4 : vector<1x64xf32> to vector<8x64xf32>
    %73 = arith.mulf %71, %72 : vector<8x64xf32>
    %74 = vector.broadcast %5 : vector<1x64xf32> to vector<8x64xf32>
    %75 = arith.addf %73, %74 : vector<8x64xf32>
    %76 = math.tanh %75 : vector<8x64xf32>
    %c32 = arith.constant 32 : index
    %c0_31 = arith.constant 0 : index
    %77 = vector.load %arg4[%c32, %c0_31] : memref<160x64xf32, #tpu.memory_space<vmem>>, vector<64x64xf32>
    %cst_32 = arith.constant dense<0.000000e+00> : vector<8x64xf32>
    %78 = tpu.matmul %76, %77, %cst_32 {dimension_numbers = #tpu.dot_dimension_numbers<[1], [0], [0], [1], [0, 0, 1, 1], [], []>} : vector<8x64xf32>, vector<64x64xf32>, vector<8x64xf32> -> vector<8x64xf32>
    %79 = vector.broadcast %6 : vector<1x64xf32> to vector<8x64xf32>
    %80 = arith.addf %78, %79 : vector<8x64xf32>
    %cst_33 = arith.constant 0.000000e+00 : f32
    %81 = vector.broadcast %cst_33 : f32 to vector<8x64xf32>
    %82 = arith.maximumf %80, %81 : vector<8x64xf32>
    %cst_34 = arith.constant 0.000000e+00 : f32
    %83 = vector.shape_cast %2 : vector<1x64xi1> to vector<1x64xi1>
    %84 = vector.broadcast %83 : vector<1x64xi1> to vector<8x64xi1>
    %85 = vector.broadcast %cst_34 : f32 to vector<8x64xf32>
    %86 = arith.select %84, %82, %85 : vector<8x64xi1>, vector<8x64xf32>
    %cst_35 = arith.constant dense<0.000000e+00> : vector<8xf32>
    %87 = vector.multi_reduction <add>, %86, %cst_35 [1] : vector<8x64xf32> to vector<8xf32>
    %88 = vector.shape_cast %87 : vector<8xf32> to vector<8x1xf32>
    %cst_36 = arith.constant 0.000000e+00 : f32
    %89 = vector.shape_cast %2 : vector<1x64xi1> to vector<1x64xi1>
    %90 = vector.broadcast %89 : vector<1x64xi1> to vector<8x64xi1>
    %91 = vector.broadcast %cst_36 : f32 to vector<8x64xf32>
    %92 = arith.select %90, %91, %82 : vector<8x64xi1>, vector<8x64xf32>
    %cst_37 = arith.constant dense<0.000000e+00> : vector<8xf32>
    %93 = vector.multi_reduction <add>, %92, %cst_37 [1] : vector<8x64xf32> to vector<8xf32>
    %94 = vector.shape_cast %93 : vector<8xf32> to vector<8x1xf32>
    %95 = vector.shape_cast %2 : vector<1x64xi1> to vector<1x64xi1>
    %96 = vector.broadcast %95 : vector<1x64xi1> to vector<8x64xi1>
    %97 = vector.shape_cast %88 : vector<8x1xf32> to vector<8x1xf32>
    %98 = vector.broadcast %97 : vector<8x1xf32> to vector<8x64xf32>
    %99 = vector.shape_cast %94 : vector<8x1xf32> to vector<8x1xf32>
    %100 = vector.broadcast %99 : vector<8x1xf32> to vector<8x64xf32>
    %101 = arith.select %96, %98, %100 : vector<8x64xi1>, vector<8x64xf32>
    %cst_38 = arith.constant 3.125000e-02 : f32
    %102 = vector.broadcast %cst_38 : f32 to vector<8x64xf32>
    %103 = arith.mulf %101, %102 : vector<8x64xf32>
    %104 = arith.subf %82, %103 : vector<8x64xf32>
    %105 = arith.mulf %104, %104 : vector<8x64xf32>
    %cst_39 = arith.constant 0.000000e+00 : f32
    %106 = vector.shape_cast %2 : vector<1x64xi1> to vector<1x64xi1>
    %107 = vector.broadcast %106 : vector<1x64xi1> to vector<8x64xi1>
    %108 = vector.broadcast %cst_39 : f32 to vector<8x64xf32>
    %109 = arith.select %107, %105, %108 : vector<8x64xi1>, vector<8x64xf32>
    %cst_40 = arith.constant dense<0.000000e+00> : vector<8xf32>
    %110 = vector.multi_reduction <add>, %109, %cst_40 [1] : vector<8x64xf32> to vector<8xf32>
    %111 = vector.shape_cast %110 : vector<8xf32> to vector<8x1xf32>
    %cst_41 = arith.constant 0.000000e+00 : f32
    %112 = vector.shape_cast %2 : vector<1x64xi1> to vector<1x64xi1>
    %113 = vector.broadcast %112 : vector<1x64xi1> to vector<8x64xi1>
    %114 = vector.broadcast %cst_41 : f32 to vector<8x64xf32>
    %115 = arith.select %113, %114, %105 : vector<8x64xi1>, vector<8x64xf32>
    %cst_42 = arith.constant dense<0.000000e+00> : vector<8xf32>
    %116 = vector.multi_reduction <add>, %115, %cst_42 [1] : vector<8x64xf32> to vector<8xf32>
    %117 = vector.shape_cast %116 : vector<8xf32> to vector<8x1xf32>
    %118 = vector.shape_cast %2 : vector<1x64xi1> to vector<1x64xi1>
    %119 = vector.broadcast %118 : vector<1x64xi1> to vector<8x64xi1>
    %120 = vector.shape_cast %111 : vector<8x1xf32> to vector<8x1xf32>
    %121 = vector.broadcast %120 : vector<8x1xf32> to vector<8x64xf32>
    %122 = vector.shape_cast %117 : vector<8x1xf32> to vector<8x1xf32>
    %123 = vector.broadcast %122 : vector<8x1xf32> to vector<8x64xf32>
    %124 = arith.select %119, %121, %123 : vector<8x64xi1>, vector<8x64xf32>
    %cst_43 = arith.constant 3.125000e-02 : f32
    %125 = vector.broadcast %cst_43 : f32 to vector<8x64xf32>
    %126 = arith.mulf %124, %125 : vector<8x64xf32>
    %cst_44 = arith.constant 9.99999974E-6 : f32
    %127 = vector.broadcast %cst_44 : f32 to vector<8x64xf32>
    %128 = arith.addf %126, %127 : vector<8x64xf32>
    %129 = math.rsqrt %128 : vector<8x64xf32>
    %130 = arith.mulf %104, %129 : vector<8x64xf32>
    %131 = vector.broadcast %7 : vector<1x64xf32> to vector<8x64xf32>
    %132 = arith.mulf %130, %131 : vector<8x64xf32>
    %133 = vector.broadcast %8 : vector<1x64xf32> to vector<8x64xf32>
    %134 = arith.addf %132, %133 : vector<8x64xf32>
    %135 = math.tanh %134 : vector<8x64xf32>
    %c96 = arith.constant 96 : index
    %c0_45 = arith.constant 0 : index
    %136 = vector.load %arg4[%c96, %c0_45] : memref<160x64xf32, #tpu.memory_space<vmem>>, vector<64x64xf32>
    %cst_46 = arith.constant dense<0.000000e+00> : vector<8x64xf32>
    %137 = tpu.matmul %135, %136, %cst_46 {dimension_numbers = #tpu.dot_dimension_numbers<[1], [0], [0], [1], [0, 0, 1, 1], [], []>} : vector<8x64xf32>, vector<64x64xf32>, vector<8x64xf32> -> vector<8x64xf32>
    %138 = vector.broadcast %9 : vector<1x64xf32> to vector<8x64xf32>
    %139 = arith.addf %137, %138 : vector<8x64xf32>
    %cst_47 = arith.constant 0.000000e+00 : f32
    %140 = vector.broadcast %cst_47 : f32 to vector<8x64xf32>
    %141 = arith.maximumf %139, %140 : vector<8x64xf32>
    %142 = vector.broadcast %10 : vector<1x64xf32> to vector<8x64xf32>
    %143 = arith.mulf %141, %142 : vector<8x64xf32>
    %cst_48 = arith.constant 0.000000e+00 : f32
    %144 = vector.shape_cast %2 : vector<1x64xi1> to vector<1x64xi1>
    %145 = vector.broadcast %144 : vector<1x64xi1> to vector<8x64xi1>
    %146 = vector.broadcast %cst_48 : f32 to vector<8x64xf32>
    %147 = arith.select %145, %143, %146 : vector<8x64xi1>, vector<8x64xf32>
    %cst_49 = arith.constant dense<0.000000e+00> : vector<8xf32>
    %148 = vector.multi_reduction <add>, %147, %cst_49 [1] : vector<8x64xf32> to vector<8xf32>
    %149 = vector.shape_cast %148 : vector<8xf32> to vector<8x1xf32>
    %c0_50 = arith.constant 0 : index
    %150 = memref.load %arg6[%c0_50] : memref<2xf32, #tpu.memory_space<smem>>
    %151 = vector.broadcast %150 : f32 to vector<8x1xf32>
    %152 = arith.addf %149, %151 : vector<8x1xf32>
    %cst_51 = arith.constant 0.000000e+00 : f32
    %153 = vector.shape_cast %2 : vector<1x64xi1> to vector<1x64xi1>
    %154 = vector.broadcast %153 : vector<1x64xi1> to vector<8x64xi1>
    %155 = vector.broadcast %cst_51 : f32 to vector<8x64xf32>
    %156 = arith.select %154, %155, %143 : vector<8x64xi1>, vector<8x64xf32>
    %cst_52 = arith.constant dense<0.000000e+00> : vector<8xf32>
    %157 = vector.multi_reduction <add>, %156, %cst_52 [1] : vector<8x64xf32> to vector<8xf32>
    %158 = vector.shape_cast %157 : vector<8xf32> to vector<8x1xf32>
    %c1_53 = arith.constant 1 : index
    %159 = memref.load %arg6[%c1_53] : memref<2xf32, #tpu.memory_space<smem>>
    %160 = vector.broadcast %159 : f32 to vector<8x1xf32>
    %161 = arith.addf %158, %160 : vector<8x1xf32>
    %162 = tpu.iota {dimensions = array<i32: 1>} : vector<8x128xi32>
    %c64_i32 = arith.constant 64 : i32
    %163 = vector.broadcast %c64_i32 : i32 to vector<8x128xi32>
    %164 = arith.cmpi slt, %162, %163 : vector<8x128xi32>
    %165 = vector.shape_cast %152 : vector<8x1xf32> to vector<8x1xf32>
    %166 = vector.broadcast %165 : vector<8x1xf32> to vector<8x128xf32>
    %167 = vector.shape_cast %161 : vector<8x1xf32> to vector<8x1xf32>
    %168 = vector.broadcast %167 : vector<8x1xf32> to vector<8x128xf32>
    %169 = arith.select %164, %166, %168 : vector<8x128xi1>, vector<8x128xf32>
    %c0_54 = arith.constant 0 : index
    %c0_55 = arith.constant 0 : index
    %170 = vector.load %arg7[%c0_54, %c0_55] : memref<8x128xf32, #tpu.memory_space<vmem>>, vector<8x128xf32>
    tpu.vector_store %arg7[%c0_54, %c0_55], %169 {strides = array<i32>} : memref<8x128xf32, #tpu.memory_space<vmem>>, vector<8x128xf32>,
    return
  }
  func.func @transform_0(%arg0: i32) -> (i32, i32) {
    %c0_i32 = arith.constant 0 : i32
    %c0_i32_0 = arith.constant 0 : i32
    return %arg0, %c0_i32 : i32, i32
  }
  func.func @transform_1(%arg0: i32) -> (i32, i32) {
    %c0_i32 = arith.constant 0 : i32
    %c0_i32_0 = arith.constant 0 : i32
    return %arg0, %c0_i32 : i32, i32
  }
  func.func @transform_2(%arg0: i32) -> (i32, i32) {
    %c0_i32 = arith.constant 0 : i32
    %c0_i32_0 = arith.constant 0 : i32
    return %arg0, %c0_i32 : i32, i32
  }
  func.func @transform_3(%arg0: i32) -> (i32, i32) {
    %c0_i32 = arith.constant 0 : i32
    %c0_i32_0 = arith.constant 0 : i32
    %c0_i32_1 = arith.constant 0 : i32
    return %c0_i32, %c0_i32_0 : i32, i32
  }
  func.func @transform_4(%arg0: i32) -> (i32, i32) {
    %c0_i32 = arith.constant 0 : i32
    %c0_i32_0 = arith.constant 0 : i32
    %c0_i32_1 = arith.constant 0 : i32
    return %c0_i32, %c0_i32_0 : i32, i32
  }
  func.func @transform_5(%arg0: i32) -> i32 {
    %c0_i32 = arith.constant 0 : i32
    %c0_i32_0 = arith.constant 0 : i32
    return %c0_i32 : i32
  }
  func.func @transform_6(%arg0: i32) -> (i32, i32) {
    %c0_i32 = arith.constant 0 : i32
    %c0_i32_0 = arith.constant 0 : i32
    return %arg0, %c0_i32 : i32, i32
  }
}

</mosaic_0001>

<llo_original>
// kernel: forward.1
$region0: #{forward.1}
  #allocation0 [shape = 'u32[]', space=smem, size = 0x4, offset = 0x4, fixed_abs, tag = 'smem constant byte address 0x4 - core index']
  #allocation1 [shape = 'u32[144,128]{1,0:T(1,128)}', space=vmem, size = 0x12000, scoped, tag = 'internal scratch']
  %s0 = inlined_call_operand.vmem [shape: f32[8,11], index: 0, kind: input, shape index: {}]
  %s1 = inlined_call_operand.vmem [shape: f32[8,3], index: 1, kind: input, shape index: {}]
  %s2 = inlined_call_operand.vmem [shape: f32[8,4], index: 2, kind: input, shape index: {}]
  %s3 = inlined_call_operand.vmem [shape: f32[160,64], index: 3, kind: input, shape index: {}]
  %s4 = inlined_call_operand.vmem [shape: f32[8,64], index: 4, kind: input, shape index: {}]
  %s5 = inlined_call_operand.vmem [shape: f32[2], index: 5, kind: input, shape index: {}]
  %s6 = inlined_call_operand.vmem [shape: f32[8,128], index: 6, kind: output, shape index: {}]
  %s7 = sld [smem:[#allocation0]]
  $region38: #{forward.1} parent=0
    _
  %s9 = ssub.s32 1, %s7
  %s10 = scalar_select 0, %s9, %s7
  $region1: #{forward.1} parent=0
    #allocation2 [shape = 'u8[512]{0}', space=smem, size = 0x200, scoped, tag = 'input window, operand 5, single buffered']
    #allocation3 [shape = 's32[1]{0}', space=sflag, size = 0x4, scoped, tag = 'scoped memory for forward.1']
    %11 = vsyncpa [#allocation3], 0
    // Predicated region
    $region2: #{forward.1} parent=1 // pred_check
      _
    $region3: #{forward.1} parent=1 // pred_check_branch
      %13 = sbr.rel (0) target = $region5
    $region4: #{forward.1} parent=1 // pred_region
      _
    $region5: #{forward.1} parent=1 // pred_fallthru
      _
    // Predicated region
    $region6: #{forward.1} parent=1 // pred_check
      _
    $region7: #{forward.1} parent=1 // pred_check_branch
      %15 = sbr.rel (0) target = $region9
    $region8: #{forward.1} parent=1 // pred_region
      _
    $region9: #{forward.1} parent=1 // pred_fallthru
      _
    // Predicated region
    $region10: #{forward.1} parent=1 // pred_check
      _
    $region11: #{forward.1} parent=1 // pred_check_branch
      %17 = sbr.rel (0) target = $region13
    $region12: #{forward.1} parent=1 // pred_region
      _
    $region13: #{forward.1} parent=1 // pred_fallthru
      _
    // Predicated region
    $region14: #{forward.1} parent=1 // pred_check
      _
    $region15: #{forward.1} parent=1 // pred_check_branch
      %19 = sbr.rel (0) target = $region17
    $region16: #{forward.1} parent=1 // pred_region
      _
    $region17: #{forward.1} parent=1 // pred_fallthru
      _
    // Predicated region
    $region18: #{forward.1} parent=1 // pred_check
      _
    $region19: #{forward.1} parent=1 // pred_check_branch
      %21 = sbr.rel (0) target = $region21
    $region20: #{forward.1} parent=1 // pred_region
      _
    $region21: #{forward.1} parent=1 // pred_fallthru
      _
    // Predicated region
    $region22: #{forward.1} parent=1 // pred_check
      _
    $region23: #{forward.1} parent=1 // pred_check_branch
      %23 = sbr.rel (0) target = $region25
    $region24: #{forward.1} parent=1 // pred_region
      %s25 = ssub.s32 16, 16
      %26 = vsyncadd [#allocation3], %s25
      %s28 = sshll.u32 %s5, 4
      %s29 = int_to_ptr.vmem [resolvable:$true] %s28
      %31 = dma.vmem_to_smem %s29, 16, [#allocation2], [#allocation3]
    $region25: #{forward.1} parent=1 // pred_fallthru
      _
    // Predicated region
    $region26: #{forward.1} parent=1 // pred_check
      _
    $region27: #{forward.1} parent=1 // pred_check_branch
      %33 = sbr.rel (0) target = $region29
    $region28: #{forward.1} parent=1 // pred_region
      %34 = dma.done [#allocation3], 16
    $region29: #{forward.1} parent=1 // pred_fallthru
      _
    %35 = sfence
    %v36 = vlaneseq
    %v37 = vand.u32 %v36, 127
    %vm38 = vcmp.lt.s32.totalorder %v37, 32
    %v39 = vld [vmem:[%s4] sm:$0x1]
    %v40 = vld [vmem:[%s4 + $0x1] sm:$0x1]
    %v41 = vld [vmem:[%s4 + $0x2] sm:$0x1]
    %v42 = vld [vmem:[%s4 + $0x3] sm:$0x1]
    %v43 = vld [vmem:[%s4 + $0x4] sm:$0x1]
    %v44 = vld [vmem:[%s4 + $0x5] sm:$0x1]
    %v45 = vld [vmem:[%s4 + $0x6] sm:$0x1]
    %v46 = vld [vmem:[%s4 + $0x7] sm:$0x1]
    %v47 = vld [vmem:[%s0] sm:$0xff]
    %v48 = vld [vmem:[%s3] sm:$0xff]
    %v49 = vld [vmem:[%s3 + $0x8] sm:$0x7]
    %v50 = vld [vmem:[%s1] sm:$0xff]
    %v51 = vld [vmem:[%s3 + $0x10] sm:$0x7]
    %vm52 = vcmask 23552
    %v54 = vsel %vm52, %v50, 0
    %vm56 = vcmask 1042432
    %v58 = vsel %vm56, %v51, 0
    %60 = vmatprep.subr.mxu0 0.0
    %61 = vmatpush1.msra.mxu0 %v58
    %62 = vmatprep.subr.mxu0 0.0
    %63 = vmatpush1.msra.mxu0 0.0
    %64 = vmatprep.subr.mxu0 0.0
    %65 = vmatpush1.msra.mxu0 0.0
    %66 = vmatprep.subr.mxu0 0.0
    %67 = vmatpush1.msra.mxu0 0.0
    %68 = vmatprep.subr.mxu0 0.0
    %69 = vmatpush1.msra.mxu0 0.0
    %70 = vmatprep.subr.mxu0 0.0
    %71 = vmatpush1.msra.mxu0 0.0
    %72 = vmatprep.subr.mxu0 0.0
    %73 = vmatpush1.msra.mxu0 0.0
    %74 = vmatprep.subr.mxu0 0.0
    %75 = vmatpush1.msra.mxu0 0.0
    %76 = vmatprep.subr.mxu0 0.0
    %77 = vmatpush1.msra.mxu0 0.0
    %78 = vmatprep.subr.mxu0 0.0
    %79 = vmatpush1.msra.mxu0 0.0
    %80 = vmatprep.subr.mxu0 0.0
    %81 = vmatpush1.msra.mxu0 0.0
    %82 = vmatprep.subr.mxu0 0.0
    %83 = vmatpush1.msra.mxu0 0.0
    %84 = vmatprep.subr.mxu0 0.0
    %85 = vmatpush1.msra.mxu0 0.0
    %86 = vmatprep.subr.mxu0 0.0
    %87 = vmatpush1.msra.mxu0 0.0
    %88 = vmatprep.subr.mxu0 0.0
    %89 = vmatpush1.msra.mxu0 0.0
    %90 = vmatprep.subr.mxu0 0.0
    %91 = vmatpush1.msra.mxu0 0.0
    %92 = vmatprep.subr.mxu0 0.0
    %93 = vmatpush1.msra.mxu0 0.0
    %94 = vmatprep.subr.mxu0 0.0
    %95 = vmatpush1.msra.mxu0 0.0
    %96 = vmatprep.subr.mxu0 0.0
    %97 = vmatpush1.msra.mxu0 0.0
    %98 = vmatprep.subr.mxu0 0.0
    %99 = vmatpush1.msra.mxu0 0.0
    %100 = vmatprep.subr.mxu0 0.0
    %101 = vmatpush1.msra.mxu0 0.0
    %102 = vmatprep.subr.mxu0 0.0
    %103 = vmatpush1.msra.mxu0 0.0
    %104 = vmatprep.subr.mxu0 0.0
    %105 = vmatpush1.msra.mxu0 0.0
    %106 = vmatprep.subr.mxu0 0.0
    %107 = vmatpush1.msra.mxu0 0.0
    %108 = vmatprep.subr.mxu0 0.0
    %109 = vmatpush1.msra.mxu0 0.0
    %110 = vmatprep.subr.mxu0 0.0
    %111 = vmatpush1.msra.mxu0 0.0
    %112 = vmatprep.subr.mxu0 0.0
    %113 = vmatpush1.msra.mxu0 0.0
    %114 = vmatprep.subr.mxu0 0.0
    %115 = vmatpush1.msra.mxu0 0.0
    %116 = vmatprep.subr.mxu0 0.0
    %117 = vmatpush1.msra.mxu0 0.0
    %118 = vmatprep.subr.mxu0 0.0
    %119 = vmatpush1.msra.mxu0 0.0
    %120 = vmatprep.subr.mxu0 0.0
    %121 = vmatpush1.msra.mxu0 0.0
    %122 = vmatprep.subr.mxu0 0.0
    %123 = vmatpush1.msra.mxu0 0.0
    %124 = vmatprep.mubr.f32.mxu0 0.0
    %125 = vmatmul.mubr.f32.gmra.mrb[0].mxu0 %v54
    %v126 = vpop.f32.mrb[0].mxu0
    %v127 = vadd.f32 0.0, %v126
    %v128 = vpop.f32.mrb[0].mxu0
    %129 = vdwg.mxu0
    %vm130 = vcmask 89088
    %v132 = vsel %vm130, %v47, 0
    %v135 = vsel %vm56, %v49, 0
    %137 = vmatprep.subr.mxu0 0.0
    %138 = vmatpush1.msra.mxu0 %v48
    %139 = vmatprep.subr.mxu0 0.0
    %140 = vmatpush1.msra.mxu0 %v135
    %141 = vmatprep.subr.mxu0 0.0
    %142 = vmatpush1.msra.mxu0 0.0
    %143 = vmatprep.subr.mxu0 0.0
    %144 = vmatpush1.msra.mxu0 0.0
    %145 = vmatprep.subr.mxu0 0.0
    %146 = vmatpush1.msra.mxu0 0.0
    %147 = vmatprep.subr.mxu0 0.0
    %148 = vmatpush1.msra.mxu0 0.0
    %149 = vmatprep.subr.mxu0 0.0
    %150 = vmatpush1.msra.mxu0 0.0
    %151 = vmatprep.subr.mxu0 0.0
    %152 = vmatpush1.msra.mxu0 0.0
    %153 = vmatprep.subr.mxu0 0.0
    %154 = vmatpush1.msra.mxu0 0.0
    %155 = vmatprep.subr.mxu0 0.0
    %156 = vmatpush1.msra.mxu0 0.0
    %157 = vmatprep.subr.mxu0 0.0
    %158 = vmatpush1.msra.mxu0 0.0
    %159 = vmatprep.subr.mxu0 0.0
    %160 = vmatpush1.msra.mxu0 0.0
    %161 = vmatprep.subr.mxu0 0.0
    %162 = vmatpush1.msra.mxu0 0.0
    %163 = vmatprep.subr.mxu0 0.0
    %164 = vmatpush1.msra.mxu0 0.0
    %165 = vmatprep.subr.mxu0 0.0
    %166 = vmatpush1.msra.mxu0 0.0
    %167 = vmatprep.subr.mxu0 0.0
    %168 = vmatpush1.msra.mxu0 0.0
    %169 = vmatprep.subr.mxu0 0.0
    %170 = vmatpush1.msra.mxu0 0.0
    %171 = vmatprep.subr.mxu0 0.0
    %172 = vmatpush1.msra.mxu0 0.0
    %173 = vmatprep.subr.mxu0 0.0
    %174 = vmatpush1.msra.mxu0 0.0
    %175 = vmatprep.subr.mxu0 0.0
    %176 = vmatpush1.msra.mxu0 0.0
    %177 = vmatprep.subr.mxu0 0.0
    %178 = vmatpush1.msra.mxu0 0.0
    %179 = vmatprep.subr.mxu0 0.0
    %180 = vmatpush1.msra.mxu0 0.0
    %181 = vmatprep.subr.mxu0 0.0
    %182 = vmatpush1.msra.mxu0 0.0
    %183 = vmatprep.subr.mxu0 0.0
    %184 = vmatpush1.msra.mxu0 0.0
    %185 = vmatprep.subr.mxu0 0.0
    %186 = vmatpush1.msra.mxu0 0.0
    %187 = vmatprep.subr.mxu0 0.0
    %188 = vmatpush1.msra.mxu0 0.0
    %189 = vmatprep.subr.mxu0 0.0
    %190 = vmatpush1.msra.mxu0 0.0
    %191 = vmatprep.subr.mxu0 0.0
    %192 = vmatpush1.msra.mxu0 0.0
    %193 = vmatprep.subr.mxu0 0.0
    %194 = vmatpush1.msra.mxu0 0.0
    %195 = vmatprep.subr.mxu0 0.0
    %196 = vmatpush1.msra.mxu0 0.0
    %197 = vmatprep.subr.mxu0 0.0
    %198 = vmatpush1.msra.mxu0 0.0
    %199 = vmatprep.subr.mxu0 0.0
    %200 = vmatpush1.msra.mxu0 0.0
    %201 = vmatprep.mubr.f32.mxu0 0.0
    %202 = vmatmul.mubr.f32.gmra.mrb[0].mxu0 %v132
    %v203 = vpop.f32.mrb[0].mxu0
    %v204 = vadd.f32 %v127, %v203
    %v205 = vpop.f32.mrb[0].mxu0
    %206 = vdwg.mxu0
    %v207 = vld [vmem:[%s2] sm:$0xff]
    %v208 = vld [vmem:[%s3 + $0x18] sm:$0xf]
    %vm209 = vcmask 31744
    %v211 = vsel %vm209, %v207, 0
    %vm213 = vcmask 1043456
    %v215 = vsel %vm213, %v208, 0
    %217 = vmatprep.subr.mxu0 0.0
    %218 = vmatpush1.msra.mxu0 %v215
    %219 = vmatprep.subr.mxu0 0.0
    %220 = vmatpush1.msra.mxu0 0.0
    %221 = vmatprep.subr.mxu0 0.0
    %222 = vmatpush1.msra.mxu0 0.0
    %223 = vmatprep.subr.mxu0 0.0
    %224 = vmatpush1.msra.mxu0 0.0
    %225 = vmatprep.subr.mxu0 0.0
    %226 = vmatpush1.msra.mxu0 0.0
    %227 = vmatprep.subr.mxu0 0.0
    %228 = vmatpush1.msra.mxu0 0.0
    %229 = vmatprep.subr.mxu0 0.0
    %230 = vmatpush1.msra.mxu0 0.0
    %231 = vmatprep.subr.mxu0 0.0
    %232 = vmatpush1.msra.mxu0 0.0
    %233 = vmatprep.subr.mxu0 0.0
    %234 = vmatpush1.msra.mxu0 0.0
    %235 = vmatprep.subr.mxu0 0.0
    %236 = vmatpush1.msra.mxu0 0.0
    %237 = vmatprep.subr.mxu0 0.0
    %238 = vmatpush1.msra.mxu0 0.0
    %239 = vmatprep.subr.mxu0 0.0
    %240 = vmatpush1.msra.mxu0 0.0
    %241 = vmatprep.subr.mxu0 0.0
    %242 = vmatpush1.msra.mxu0 0.0
    %243 = vmatprep.subr.mxu0 0.0
    %244 = vmatpush1.msra.mxu0 0.0
    %245 = vmatprep.subr.mxu0 0.0
    %246 = vmatpush1.msra.mxu0 0.0
    %247 = vmatprep.subr.mxu0 0.0
    %248 = vmatpush1.msra.mxu0 0.0
    %249 = vmatprep.subr.mxu0 0.0
    %250 = vmatpush1.msra.mxu0 0.0
    %251 = vmatprep.subr.mxu0 0.0
    %252 = vmatpush1.msra.mxu0 0.0
    %253 = vmatprep.subr.mxu0 0.0
    %254 = vmatpush1.msra.mxu0 0.0
    %255 = vmatprep.subr.mxu0 0.0
    %256 = vmatpush1.msra.mxu0 0.0
    %257 = vmatprep.subr.mxu0 0.0
    %258 = vmatpush1.msra.mxu0 0.0
    %259 = vmatprep.subr.mxu0 0.0
    %260 = vmatpush1.msra.mxu0 0.0
    %261 = vmatprep.subr.mxu0 0.0
    %262 = vmatpush1.msra.mxu0 0.0
    %263 = vmatprep.subr.mxu0 0.0
    %264 = vmatpush1.msra.mxu0 0.0
    %265 = vmatprep.subr.mxu0 0.0
    %266 = vmatpush1.msra.mxu0 0.0
    %267 = vmatprep.subr.mxu0 0.0
    %268 = vmatpush1.msra.mxu0 0.0
    %269 = vmatprep.subr.mxu0 0.0
    %270 = vmatpush1.msra.mxu0 0.0
    %271 = vmatprep.subr.mxu0 0.0
    %272 = vmatpush1.msra.mxu0 0.0
    %273 = vmatprep.subr.mxu0 0.0
    %274 = vmatpush1.msra.mxu0 0.0
    %275 = vmatprep.subr.mxu0 0.0
    %276 = vmatpush1.msra.mxu0 0.0
    %277 = vmatprep.subr.mxu0 0.0
    %278 = vmatpush1.msra.mxu0 0.0
    %279 = vmatprep.subr.mxu0 0.0
    %280 = vmatpush1.msra.mxu0 0.0
    %281 = vmatprep.mubr.f32.mxu0 0.0
    %282 = vmatmul.mubr.f32.gmra.mrb[0].mxu0 %v211
    %v283 = vpop.f32.mrb[0].mxu0
    %v284 = vadd.f32 0.0, %v283
    %v285 = vpop.f32.mrb[0].mxu0
    %286 = vdwg.mxu0
    %v287 = vadd.f32 %v204, %v284
    %v288 = vlaneseq
    %v289 = vshrl.u32 %v288, 7
    %v290 = vsub.s32 0, %v289
    %v291 = vrot.slane %v39, %v290
    %v292 = vadd.f32 %v287, %v291
    %v293 = vsel %vm38, 1, 0
    %vm294 = vcmp.eq.s32.totalorder %v293, 1
    %v295 = vsel %vm294, %v292, 0.0
    %vm296 = vcmask 523264
    %v297 = vsel %vm296, %v295, 0.0
    %298 = vadd.xlane.f32.xlu0 %v297
    %v299 = vpop.xlane.xlu0 %298
    %v300 = vsel %vm294, 0.0, %v292
    %v301 = vsel %vm296, %v300, 0.0
    %302 = vadd.xlane.f32.xlu0 %v301
    %v303 = vpop.xlane.xlu0 %302
    %v304 = vsel %vm294, %v299, %v303
    %v305 = vmul.f32 %v304, 0.03125
    %v306 = vsub.f32 %v292, %v305
    %v307 = vmul.f32 %v306, %v306
    %v308 = vsel %vm294, %v307, 0.0
    %v309 = vsel %vm296, %v308, 0.0
    %310 = vadd.xlane.f32.xlu0 %v309
    %v311 = vpop.xlane.xlu0 %310
    %v312 = vsel %vm294, 0.0, %v307
    %v313 = vsel %vm296, %v312, 0.0
    %314 = vadd.xlane.f32.xlu0 %v313
    %v315 = vpop.xlane.xlu0 %314
    %v316 = vsel %vm294, %v311, %v315
    %v317 = vmul.f32 %v316, 0.03125
    %v318 = vadd.f32 %v317, 1e-05
    %v319 = vrsqrt.pop %v318
    %v320 = vmul.f32 %v306, %v319
    %v321 = vlaneseq
    %v322 = vshrl.u32 %v321, 7
    %v323 = vsub.s32 0, %v322
    %v324 = vrot.slane %v40, %v323
    %v325 = vmul.f32 %v320, %v324
    %v326 = vlaneseq
    %v327 = vshrl.u32 %v326, 7
    %v328 = vsub.s32 0, %v327
    %v329 = vrot.slane %v41, %v328
    %v330 = vadd.f32 %v325, %v329
    %v331 = vtanh.pop %v330
    %v332 = vld [vmem:[%s3 + $0x20] sm:$0xff]
    %v333 = vld [vmem:[%s3 + $0x28] sm:$0xff]
    %v334 = vld [vmem:[%s3 + $0x30] sm:$0xff]
    %v335 = vld [vmem:[%s3 + $0x38] sm:$0xff]
    %v336 = vld [vmem:[%s3 + $0x40] sm:$0xff]
    %v337 = vld [vmem:[%s3 + $0x48] sm:$0xff]
    %v338 = vld [vmem:[%s3 + $0x50] sm:$0xff]
    %v339 = vld [vmem:[%s3 + $0x58] sm:$0xff]
    %v340 = vlaneseq
    %v341 = vshrl.u32 %v340, 7
    %v342 = vsub.s32 0, %v341
    %v343 = vrot.slane %v42, %v342
    %v345 = vsel %vm296, %v331, 0
    %347 = vmatprep.subr.mxu0 0.0
    %348 = vmatpush1.msra.mxu0 %v332
    %349 = vmatprep.subr.mxu0 0.0
    %350 = vmatpush1.msra.mxu0 %v333
    %351 = vmatprep.subr.mxu0 0.0
    %352 = vmatpush1.msra.mxu0 %v334
    %353 = vmatprep.subr.mxu0 0.0
    %354 = vmatpush1.msra.mxu0 %v335
    %355 = vmatprep.subr.mxu0 0.0
    %356 = vmatpush1.msra.mxu0 %v336
    %357 = vmatprep.subr.mxu0 0.0
    %358 = vmatpush1.msra.mxu0 %v337
    %359 = vmatprep.subr.mxu0 0.0
    %360 = vmatpush1.msra.mxu0 %v338
    %361 = vmatprep.subr.mxu0 0.0
    %362 = vmatpush1.msra.mxu0 %v339
    %363 = vmatprep.subr.mxu0 0.0
    %364 = vmatpush1.msra.mxu0 0.0
    %365 = vmatprep.subr.mxu0 0.0
    %366 = vmatpush1.msra.mxu0 0.0
    %367 = vmatprep.subr.mxu0 0.0
    %368 = vmatpush1.msra.mxu0 0.0
    %369 = vmatprep.subr.mxu0 0.0
    %370 = vmatpush1.msra.mxu0 0.0
    %371 = vmatprep.subr.mxu0 0.0
    %372 = vmatpush1.msra.mxu0 0.0
    %373 = vmatprep.subr.mxu0 0.0
    %374 = vmatpush1.msra.mxu0 0.0
    %375 = vmatprep.subr.mxu0 0.0
    %376 = vmatpush1.msra.mxu0 0.0
    %377 = vmatprep.subr.mxu0 0.0
    %378 = vmatpush1.msra.mxu0 0.0
    %379 = vmatprep.subr.mxu0 0.0
    %380 = vmatpush1.msra.mxu0 0.0
    %381 = vmatprep.subr.mxu0 0.0
    %382 = vmatpush1.msra.mxu0 0.0
    %383 = vmatprep.subr.mxu0 0.0
    %384 = vmatpush1.msra.mxu0 0.0
    %385 = vmatprep.subr.mxu0 0.0
    %386 = vmatpush1.msra.mxu0 0.0
    %387 = vmatprep.subr.mxu0 0.0
    %388 = vmatpush1.msra.mxu0 0.0
    %389 = vmatprep.subr.mxu0 0.0
    %390 = vmatpush1.msra.mxu0 0.0
    %391 = vmatprep.subr.mxu0 0.0
    %392 = vmatpush1.msra.mxu0 0.0
    %393 = vmatprep.subr.mxu0 0.0
    %394 = vmatpush1.msra.mxu0 0.0
    %395 = vmatprep.subr.mxu0 0.0
    %396 = vmatpush1.msra.mxu0 0.0
    %397 = vmatprep.subr.mxu0 0.0
    %398 = vmatpush1.msra.mxu0 0.0
    %399 = vmatprep.subr.mxu0 0.0
    %400 = vmatpush1.msra.mxu0 0.0
    %401 = vmatprep.subr.mxu0 0.0
    %402 = vmatpush1.msra.mxu0 0.0
    %403 = vmatprep.subr.mxu0 0.0
    %404 = vmatpush1.msra.mxu0 0.0
    %405 = vmatprep.subr.mxu0 0.0
    %406 = vmatpush1.msra.mxu0 0.0
    %407 = vmatprep.subr.mxu0 0.0
    %408 = vmatpush1.msra.mxu0 0.0
    %409 = vmatprep.subr.mxu0 0.0
    %410 = vmatpush1.msra.mxu0 0.0
    %411 = vmatprep.mubr.f32.mxu0 0.0
    %412 = vmatmul.mubr.f32.gmra.mrb[0].mxu0 %v345
    %v413 = vpop.f32.mrb[0].mxu0
    %v414 = vadd.f32 %v343, %v413
    %v415 = vpop.f32.mrb[0].mxu0
    %416 = vdwg.mxu0
    %v417 = vmax.f32 %v414, 0.0
    %v418 = vsel %vm294, %v417, 0.0
    %v419 = vsel %vm296, %v418, 0.0
    %420 = vadd.xlane.f32.xlu0 %v419
    %v421 = vpop.xlane.xlu0 %420
    %v422 = vsel %vm294, 0.0, %v417
    %v423 = vsel %vm296, %v422, 0.0
    %424 = vadd.xlane.f32.xlu0 %v423
    %v425 = vpop.xlane.xlu0 %424
    %v426 = vsel %vm294, %v421, %v425
    %v427 = vmul.f32 %v426, 0.03125
    %v428 = vsub.f32 %v417, %v427
    %v429 = vmul.f32 %v428, %v428
    %v430 = vsel %vm294, %v429, 0.0
    %v431 = vsel %vm296, %v430, 0.0
    %432 = vadd.xlane.f32.xlu0 %v431
    %v433 = vpop.xlane.xlu0 %432
    %v434 = vsel %vm294, 0.0, %v429
    %v435 = vsel %vm296, %v434, 0.0
    %436 = vadd.xlane.f32.xlu0 %v435
    %v437 = vpop.xlane.xlu0 %436
    %v438 = vsel %vm294, %v433, %v437
    %v439 = vmul.f32 %v438, 0.03125
    %v440 = vadd.f32 %v439, 1e-05
    %v441 = vrsqrt.pop %v440
    %v442 = vmul.f32 %v428, %v441
    %v443 = vlaneseq
    %v444 = vshrl.u32 %v443, 7
    %v445 = vsub.s32 0, %v444
    %v446 = vrot.slane %v43, %v445
    %v447 = vmul.f32 %v442, %v446
    %v448 = vlaneseq
    %v449 = vshrl.u32 %v448, 7
    %v450 = vsub.s32 0, %v449
    %v451 = vrot.slane %v44, %v450
    %v452 = vadd.f32 %v447, %v451
    %v453 = vtanh.pop %v452
    %v454 = vld [vmem:[%s3 + $0x60] sm:$0xff]
    %v455 = vld [vmem:[%s3 + $0x68] sm:$0xff]
    %v456 = vld [vmem:[%s3 + $0x70] sm:$0xff]
    %v457 = vld [vmem:[%s3 + $0x78] sm:$0xff]
    %v458 = vld [vmem:[%s3 + $0x80] sm:$0xff]
    %v459 = vld [vmem:[%s3 + $0x88] sm:$0xff]
    %v460 = vld [vmem:[%s3 + $0x90] sm:$0xff]
    %v461 = vld [vmem:[%s3 + $0x98] sm:$0xff]
    %v462 = vlaneseq
    %v463 = vshrl.u32 %v462, 7
    %v464 = vsub.s32 0, %v463
    %v465 = vrot.slane %v45, %v464
    %v467 = vsel %vm296, %v453, 0
    %469 = vmatprep.subr.mxu0 0.0
    %470 = vmatpush1.msra.mxu0 %v454
    %471 = vmatprep.subr.mxu0 0.0
    %472 = vmatpush1.msra.mxu0 %v455
    %473 = vmatprep.subr.mxu0 0.0
    %474 = vmatpush1.msra.mxu0 %v456
    %475 = vmatprep.subr.mxu0 0.0
    %476 = vmatpush1.msra.mxu0 %v457
    %477 = vmatprep.subr.mxu0 0.0
    %478 = vmatpush1.msra.mxu0 %v458
    %479 = vmatprep.subr.mxu0 0.0
    %480 = vmatpush1.msra.mxu0 %v459
    %481 = vmatprep.subr.mxu0 0.0
    %482 = vmatpush1.msra.mxu0 %v460
    %483 = vmatprep.subr.mxu0 0.0
    %484 = vmatpush1.msra.mxu0 %v461
    %485 = vmatprep.subr.mxu0 0.0
    %486 = vmatpush1.msra.mxu0 0.0
    %487 = vmatprep.subr.mxu0 0.0
    %488 = vmatpush1.msra.mxu0 0.0
    %489 = vmatprep.subr.mxu0 0.0
    %490 = vmatpush1.msra.mxu0 0.0
    %491 = vmatprep.subr.mxu0 0.0
    %492 = vmatpush1.msra.mxu0 0.0
    %493 = vmatprep.subr.mxu0 0.0
    %494 = vmatpush1.msra.mxu0 0.0
    %495 = vmatprep.subr.mxu0 0.0
    %496 = vmatpush1.msra.mxu0 0.0
    %497 = vmatprep.subr.mxu0 0.0
    %498 = vmatpush1.msra.mxu0 0.0
    %499 = vmatprep.subr.mxu0 0.0
    %500 = vmatpush1.msra.mxu0 0.0
    %501 = vmatprep.subr.mxu0 0.0
    %502 = vmatpush1.msra.mxu0 0.0
    %503 = vmatprep.subr.mxu0 0.0
    %504 = vmatpush1.msra.mxu0 0.0
    %505 = vmatprep.subr.mxu0 0.0
    %506 = vmatpush1.msra.mxu0 0.0
    %507 = vmatprep.subr.mxu0 0.0
    %508 = vmatpush1.msra.mxu0 0.0
    %509 = vmatprep.subr.mxu0 0.0
    %510 = vmatpush1.msra.mxu0 0.0
    %511 = vmatprep.subr.mxu0 0.0
    %512 = vmatpush1.msra.mxu0 0.0
    %513 = vmatprep.subr.mxu0 0.0
    %514 = vmatpush1.msra.mxu0 0.0
    %515 = vmatprep.subr.mxu0 0.0
    %516 = vmatpush1.msra.mxu0 0.0
    %517 = vmatprep.subr.mxu0 0.0
    %518 = vmatpush1.msra.mxu0 0.0
    %519 = vmatprep.subr.mxu0 0.0
    %520 = vmatpush1.msra.mxu0 0.0
    %521 = vmatprep.subr.mxu0 0.0
    %522 = vmatpush1.msra.mxu0 0.0
    %523 = vmatprep.subr.mxu0 0.0
    %524 = vmatpush1.msra.mxu0 0.0
    %525 = vmatprep.subr.mxu0 0.0
    %526 = vmatpush1.msra.mxu0 0.0
    %527 = vmatprep.subr.mxu0 0.0
    %528 = vmatpush1.msra.mxu0 0.0
    %529 = vmatprep.subr.mxu0 0.0
    %530 = vmatpush1.msra.mxu0 0.0
    %531 = vmatprep.subr.mxu0 0.0
    %532 = vmatpush1.msra.mxu0 0.0
    %533 = vmatprep.mubr.f32.mxu0 0.0
    %534 = vmatmul.mubr.f32.gmra.mrb[0].mxu0 %v467
    %v535 = vpop.f32.mrb[0].mxu0
    %v536 = vadd.f32 %v465, %v535
    %v537 = vpop.f32.mrb[0].mxu0
    %538 = vdwg.mxu0
    %v539 = vmax.f32 %v536, 0.0
    %v540 = vlaneseq
    %v541 = vshrl.u32 %v540, 7
    %v542 = vsub.s32 0, %v541
    %v543 = vrot.slane %v46, %v542
    %v544 = vmul.f32 %v539, %v543
    %v545 = vsel %vm294, %v544, 0.0
    %v546 = vsel %vm296, %v545, 0.0
    %547 = vadd.xlane.f32.xlu0 %v546
    %v548 = vpop.xlane.xlu0 %547
    %s549 = sld [smem:[#allocation2]]
    %v550 = vstv %s549
    %v551 = vadd.f32 %v548, %v550
    %v552 = vsel %vm294, 0.0, %v544
    %v553 = vsel %vm296, %v552, 0.0
    %554 = vadd.xlane.f32.xlu0 %v553
    %v555 = vpop.xlane.xlu0 %554
    %s556 = sld [smem:[#allocation2 + $0x1]]
    %v557 = vstv %s556
    %v558 = vadd.f32 %v555, %v557
    %vm559 = vcmp.lt.s32.totalorder %v37, 64
    %v560 = vsel %vm559, %v551, %v558
    %561 = vst [vmem:[%s6] sm:$0xff] %v560
    // Predicated region
    $region30: #{forward.1} parent=1 // pred_check
      _
    $region31: #{forward.1} parent=1 // pred_check_branch
      %563 = sbr.rel (0) target = $region33
    $region32: #{forward.1} parent=1 // pred_region
      _
    $region33: #{forward.1} parent=1 // pred_fallthru
      _
    // Predicated region
    $region34: #{forward.1} parent=1 // pred_check
      _
    $region35: #{forward.1} parent=1 // pred_check_branch
      %565 = sbr.rel (0) target = $region37
    $region36: #{forward.1} parent=1 // pred_region
      _
    $region37: #{forward.1} parent=1 // pred_fallthru
      _
    %566 = vsyncpa [#allocation3], 1

</llo_original>
